<compile_context>
chip_gen: v7x
topology: tpu7x:2x2x1
jax: 0.10.0
libtpu: 0.0.40
codegen_flags: <defaults>
</compile_context>

<pallas_src>
import math
import jax
import jax.numpy as jnp
from jax.experimental import pallas as pl
from jax.experimental.pallas import tpu as pltpu

D_MODEL = 32            # embedding_dim (30) + 2
NHEAD = 2
HEAD_DIM = D_MODEL // NHEAD
FFN = 64                # hidden_dim / dim_feedforward
LN_EPS = 1e-5

# ---- packed bf16 weight slab layout: each weight starts on a 128-lane tile boundary
#      so in-kernel slices need no lane rotation.
_W_SLAB_SHAPE = (FFN, 4 * 128)          # (64, 512) bf16 ~= 64 KiB
_COL_QKV = 0                            # (D, 3D)  rows 0:D   (wq pre-scaled by 1/sqrt(dh))
_COL_WO = 128                           # (D, D)   rows 0:D
_COL_W1 = 256                           # (D, FFN) rows 0:D
_COL_W2 = 384                           # (FFN, D) rows 0:FFN

# ---- packed f32 bias / LayerNorm / fc slab layout (one vector per row).
_B_SLAB_SHAPE = (16, 128)               # 8 KiB
_ROW_BQKV, _ROW_BO, _ROW_LN1W, _ROW_LN1B = 0, 1, 2, 3
_ROW_B1, _ROW_B2, _ROW_LN2W, _ROW_LN2B = 4, 5, 6, 7
_ROW_WFC, _ROW_BFC = 8, 9               # fc weight stored transposed as a (1, D) row


def _ldistance_kernel(x_ref, mask_ref, pe_ref, w_ref, b_ref, out_ref):
    B, S, D = x_ref.shape
    BS = B * S
    bf16 = jnp.bfloat16

    # ---- packed parameters (static, lane/sublane-aligned slices) ----
    w_qkv = w_ref[0:D, _COL_QKV:_COL_QKV + 3 * D]          # (32, 96) bf16
    w_o = w_ref[0:D, _COL_WO:_COL_WO + D]                  # (32, 32) bf16
    w_1 = w_ref[0:D, _COL_W1:_COL_W1 + FFN]                # (32, 64) bf16
    w_2 = w_ref[0:FFN, _COL_W2:_COL_W2 + D]                # (64, 32) bf16

    b_qkv = b_ref[_ROW_BQKV:_ROW_BQKV + 1, 0:3 * D]        # (1, 96) f32 (bq pre-scaled)
    b_o = b_ref[_ROW_BO:_ROW_BO + 1, 0:D]
    ln1w = b_ref[_ROW_LN1W:_ROW_LN1W + 1, 0:D]
    ln1b = b_ref[_ROW_LN1B:_ROW_LN1B + 1, 0:D]
    b_1 = b_ref[_ROW_B1:_ROW_B1 + 1, 0:FFN]
    b_2 = b_ref[_ROW_B2:_ROW_B2 + 1, 0:D]
    ln2w = b_ref[_ROW_LN2W:_ROW_LN2W + 1, 0:D]
    ln2b = b_ref[_ROW_LN2B:_ROW_LN2B + 1, 0:D]
    w_fc = b_ref[_ROW_WFC:_ROW_WFC + 1, 0:D]               # (1, 32)
    b_fc = b_ref[_ROW_BFC:_ROW_BFC + 1, 0:1]               # (1, 1)

    # ---- positional encoding (dropout disabled in eval) ----
    x = x_ref[...] + pe_ref[...]                           # (B, S, D) f32, PE bcast over B
    xf = x.reshape(BS, D)                                  # batch fused into matmul M dim

    # additive key-padding bias computed once (1.0 == padded key)
    neg = jnp.where(mask_ref[...] > 0.5, -1e30, 0.0)       # (B, 1, S)

    # ---- fused QKV projection: one matmul, bf16 operands, f32 accumulation ----
    qkv = jnp.dot(xf.astype(bf16), w_qkv,
                  preferred_element_type=jnp.float32) + b_qkv     # (BS, 96) f32

    # ---- multi-head self-attention (batch as einsum batch dim; static head loop) ----
    head_ctx = []
    for h in range(NHEAD):                                 # NHEAD == 2, static
        lo = h * HEAD_DIM
        qh = qkv[:, lo:lo + HEAD_DIM].reshape(B, S, HEAD_DIM).astype(bf16)
        kh = qkv[:, D + lo:D + lo + HEAD_DIM].reshape(B, S, HEAD_DIM).astype(bf16)
        vh = qkv[:, 2 * D + lo:2 * D + lo + HEAD_DIM].reshape(B, S, HEAD_DIM).astype(bf16)

        s = jnp.einsum('bqd,bkd->bqk', qh, kh,
                       preferred_element_type=jnp.float32)        # (B, S, S) f32
        s = s + neg                                        # mask padded keys
        s = s - jnp.max(s, axis=-1, keepdims=True)         # f32 softmax
        p = jnp.exp(s)
        p = p * pl.reciprocal(jnp.sum(p, axis=-1, keepdims=True), approx=True)
        ctx = jnp.einsum('bqk,bkd->bqd', p.astype(bf16), vh,
                         preferred_element_type=jnp.float32)      # (B, S, Dh) f32
        head_ctx.append(ctx)

    # single output projection on concatenated heads (one matmul, no accumulation)
    attn = jnp.concatenate(head_ctx, axis=-1).reshape(BS, D)      # (BS, 32)
    attn = jnp.dot(attn.astype(bf16), w_o,
                   preferred_element_type=jnp.float32) + b_o      # (BS, 32)

    # ---- residual + LayerNorm1 (post-norm, torch default norm_first=False) ----
    x1 = xf + attn
    mu = jnp.mean(x1, axis=-1, keepdims=True)
    var = jnp.mean((x1 - mu) ** 2, axis=-1, keepdims=True)
    x1 = (x1 - mu) * jax.lax.rsqrt(var + LN_EPS) * ln1w + ln1b

    # ---- feed-forward (ReLU), residual + LayerNorm2 ----
    h1 = jnp.maximum(jnp.dot(x1.astype(bf16), w_1,
                             preferred_element_type=jnp.float32) + b_1, 0.0)   # (BS, 64)
    ff = jnp.dot(h1.astype(bf16), w_2,
                 preferred_element_type=jnp.float32) + b_2                     # (BS, 32)
    x2 = x1 + ff
    mu = jnp.mean(x2, axis=-1, keepdims=True)
    var = jnp.mean((x2 - mu) ** 2, axis=-1, keepdims=True)
    x2 = (x2 - mu) * jax.lax.rsqrt(var + LN_EPS) * ln2w + ln2b

    # ---- mean pooling over sequence (includes padded positions, as in torch) ----
    enc = jnp.mean(x2.reshape(B, S, D), axis=1)                   # (B, 32)

    # ---- fc head: Linear(D, 1) + Sigmoid, as a lane-reduce (avoids an N=1 matmul) ----
    logit = jnp.sum(enc * w_fc, axis=-1, keepdims=True) + b_fc    # (B, 1)
    out_ref[...] = jax.nn.sigmoid(logit)


def _positional_encoding(seq_len, d_model):
    position = jnp.arange(seq_len, dtype=jnp.float32)[:, None]
    div_term = jnp.exp(jnp.arange(0, d_model, 2, dtype=jnp.float32)
                       * (-math.log(10000.0) / d_model))
    pe = jnp.zeros((seq_len, d_model), jnp.float32)
    pe = pe.at[:, 0::2].set(jnp.sin(position * div_term))
    pe = pe.at[:, 1::2].set(jnp.cos(position * div_term))
    return pe


def init_params(key):
    """Deterministic synthetic init (PyTorch-style uniform(-1/sqrt(fan_in), ...))."""
    def lin(k, fan_in, shape):
        bound = 1.0 / math.sqrt(fan_in)
        return jax.random.uniform(k, shape, jnp.float32, -bound, bound)

    ks = jax.random.split(key, 12)
    D, F = D_MODEL, FFN
    return {
        "wq": lin(ks[0], D, (D, D)), "bq": lin(ks[1], D, (1, D)),
        "wk": lin(ks[2], D, (D, D)), "bk": lin(ks[3], D, (1, D)),
        "wv": lin(ks[4], D, (D, D)), "bv": lin(ks[5], D, (1, D)),
        "wo": lin(ks[6], D, (D, D)), "bo": jnp.zeros((1, D), jnp.float32),
        "ln1w": jnp.ones((1, D), jnp.float32), "ln1b": jnp.zeros((1, D), jnp.float32),
        "ln2w": jnp.ones((1, D), jnp.float32), "ln2b": jnp.zeros((1, D), jnp.float32),
        "w1": lin(ks[7], D, (D, F)), "b1": lin(ks[8], D, (1, F)),
        "w2": lin(ks[9], F, (F, D)), "b2": lin(ks[10], F, (1, D)),
        "wfc": lin(ks[11], D, (D, 1)), "bfc": jnp.zeros((1, 1), jnp.float32),
    }


def pack_params(params):
    """One-time wrapper-side packing of the 18 parameter tensors into 2 DMA slabs.

    (In real use do this once at load time, not per forward call.)
    """
    D, F = D_MODEL, FFN
    scale = 1.0 / math.sqrt(HEAD_DIM)

    w_slab = jnp.zeros(_W_SLAB_SHAPE, jnp.float32)
    w_qkv = jnp.concatenate([params["wq"] * scale, params["wk"], params["wv"]], axis=1)
    w_slab = w_slab.at[0:D, _COL_QKV:_COL_QKV + 3 * D].set(w_qkv)
    w_slab = w_slab.at[0:D, _COL_WO:_COL_WO + D].set(params["wo"])
    w_slab = w_slab.at[0:D, _COL_W1:_COL_W1 + F].set(params["w1"])
    w_slab = w_slab.at[0:F, _COL_W2:_COL_W2 + D].set(params["w2"])
    w_slab = w_slab.astype(jnp.bfloat16)        # MXU operands in bf16

    b_slab = jnp.zeros(_B_SLAB_SHAPE, jnp.float32)
    b_qkv = jnp.concatenate([params["bq"] * scale, params["bk"], params["bv"]], axis=1)
    b_slab = b_slab.at[_ROW_BQKV, 0:3 * D].set(b_qkv[0])
    b_slab = b_slab.at[_ROW_BO, 0:D].set(params["bo"][0])
    b_slab = b_slab.at[_ROW_LN1W, 0:D].set(params["ln1w"][0])
    b_slab = b_slab.at[_ROW_LN1B, 0:D].set(params["ln1b"][0])
    b_slab = b_slab.at[_ROW_B1, 0:F].set(params["b1"][0])
    b_slab = b_slab.at[_ROW_B2, 0:D].set(params["b2"][0])
    b_slab = b_slab.at[_ROW_LN2W, 0:D].set(params["ln2w"][0])
    b_slab = b_slab.at[_ROW_LN2B, 0:D].set(params["ln2b"][0])
    b_slab = b_slab.at[_ROW_WFC, 0:D].set(params["wfc"][:, 0])
    b_slab = b_slab.at[_ROW_BFC, 0:1].set(params["bfc"][0])
    return w_slab, b_slab


def ldistance_forward(operations, masks, params, batch_block=None):
    """operations: (B, S, D) float32; masks: (B, S) bool (True == padded key)."""
    B, S, D = operations.shape
    assert D == D_MODEL

    # Batch tiling: grid over B with "parallel" semantics shards across the two
    # TensorCores on v7x. At toy batch sizes keep a single program (TB == B) so the
    # batch stays fused in the matmul M dimension. A sub-batch tile must keep the
    # (TB, 1) output block sublane-aligned (TB % 8 == 0).
    TB = B if batch_block is None else batch_block
    assert TB == B or (B % TB == 0 and TB % 8 == 0)

    pe = _positional_encoding(S, D)
    mask_f = masks.astype(jnp.float32).reshape(B, 1, S)
    w_slab, b_slab = pack_params(params)

    in_specs = [
        pl.BlockSpec((TB, S, D), lambda i: (i, 0, 0)),      # activations
        pl.BlockSpec((TB, 1, S), lambda i: (i, 0, 0)),      # key-padding mask
        pl.BlockSpec((S, D), lambda i: (0, 0)),             # positional encoding
        pl.BlockSpec(_W_SLAB_SHAPE, lambda i: (0, 0)),      # bf16 weight slab
        pl.BlockSpec(_B_SLAB_SHAPE, lambda i: (0, 0)),      # f32 bias/LN/fc slab
    ]
    out_specs = pl.BlockSpec((TB, 1), lambda i: (i, 0))

    return pl.pallas_call(
        _ldistance_kernel,
        out_shape=jax.ShapeDtypeStruct((B, 1), jnp.float32),
        grid_spec=pltpu.PrefetchScalarGridSpec(
            num_scalar_prefetch=0,
            grid=(B // TB,),
            in_specs=in_specs,
            out_specs=out_specs),
        compiler_params=pltpu.CompilerParams(
            dimension_semantics=("parallel",)),
    )(operations.astype(jnp.float32), mask_f, pe, w_slab, b_slab)


if __name__ == "__main__":
    B, S = 2, 8
    key = jax.random.PRNGKey(0)
    k_ops, k_params = jax.random.split(key)

    # `operations` are already-embedded feature vectors of width d_model = emb_dim + 2
    operations = jax.random.normal(k_ops, (B, S, D_MODEL), jnp.float32)
    # key padding mask: True == position is padding (ignored as attention key)
    masks = jnp.array([[False] * 6 + [True] * 2,
                       [False] * 8], dtype=bool)

    params = init_params(k_params)
    out = ldistance_forward(operations, masks, params)
    jax.block_until_ready(out)
    assert out.shape == (B, 1) and out.dtype == jnp.float32
    assert bool(jnp.all((out >= 0.0) & (out <= 1.0)))
    print("KERNEL_OK")
</pallas_src>

<mosaic_0001>
module attributes {stable_mosaic.version = 11 : i64} {
  func.func @_ldistance_kernel(%arg0: i32, %arg1: memref<2x8x32xf32, #tpu.memory_space<vmem>>, %arg2: memref<2x1x8xf32, #tpu.memory_space<vmem>>, %arg3: memref<8x32xf32, #tpu.memory_space<vmem>>, %arg4: memref<64x512xbf16, #tpu.memory_space<vmem>>, %arg5: memref<16x128xf32, #tpu.memory_space<vmem>>, %arg6: memref<2x1xf32, #tpu.memory_space<vmem>>) attributes {dimension_semantics = [#tpu.dimension_semantics<parallel>], iteration_bounds = array<i64: 1>, scalar_prefetch = 0 : i64, scratch_operands = 0 : i64, tpu.core_type = #tpu.core_type<tc>, window_params = [{transform_indices = @transform_0, window_bounds = array<i64: 2, 8, 32>}, {transform_indices = @transform_1, window_bounds = array<i64: 2, 1, 8>}, {pipeline_mode = #tpu.pipeline_mode<synchronous>, transform_indices = @transform_2, window_bounds = array<i64: 8, 32>}, {pipeline_mode = #tpu.pipeline_mode<synchronous>, transform_indices = @transform_3, window_bounds = array<i64: 64, 512>}, {pipeline_mode = #tpu.pipeline_mode<synchronous>, transform_indices = @transform_4, window_bounds = array<i64: 16, 128>}, {transform_indices = @transform_5, window_bounds = array<i64: 2, 1>}]} {
    %c0 = arith.constant 0 : index
    %c0_0 = arith.constant 0 : index
    %0 = vector.load %arg4[%c0, %c0_0] : memref<64x512xbf16, #tpu.memory_space<vmem>>, vector<32x96xbf16>
    %c0_1 = arith.constant 0 : index
    %c128 = arith.constant 128 : index
    %1 = vector.load %arg4[%c0_1, %c128] : memref<64x512xbf16, #tpu.memory_space<vmem>>, vector<32x32xbf16>
    %c0_2 = arith.constant 0 : index
    %c256 = arith.constant 256 : index
    %2 = vector.load %arg4[%c0_2, %c256] : memref<64x512xbf16, #tpu.memory_space<vmem>>, vector<32x64xbf16>
    %c0_3 = arith.constant 0 : index
    %c384 = arith.constant 384 : index
    %3 = vector.load %arg4[%c0_3, %c384] : memref<64x512xbf16, #tpu.memory_space<vmem>>, vector<64x32xbf16>
    %c0_4 = arith.constant 0 : index
    %c0_5 = arith.constant 0 : index
    %4 = vector.load %arg5[%c0_4, %c0_5] : memref<16x128xf32, #tpu.memory_space<vmem>>, vector<1x96xf32>
    %c1 = arith.constant 1 : index
    %c0_6 = arith.constant 0 : index
    %5 = vector.load %arg5[%c1, %c0_6] : memref<16x128xf32, #tpu.memory_space<vmem>>, vector<1x32xf32>
    %c2 = arith.constant 2 : index
    %c0_7 = arith.constant 0 : index
    %6 = vector.load %arg5[%c2, %c0_7] : memref<16x128xf32, #tpu.memory_space<vmem>>, vector<1x32xf32>
    %c3 = arith.constant 3 : index
    %c0_8 = arith.constant 0 : index
    %7 = vector.load %arg5[%c3, %c0_8] : memref<16x128xf32, #tpu.memory_space<vmem>>, vector<1x32xf32>
    %c4 = arith.constant 4 : index
    %c0_9 = arith.constant 0 : index
    %8 = vector.load %arg5[%c4, %c0_9] : memref<16x128xf32, #tpu.memory_space<vmem>>, vector<1x64xf32>
    %c5 = arith.constant 5 : index
    %c0_10 = arith.constant 0 : index
    %9 = vector.load %arg5[%c5, %c0_10] : memref<16x128xf32, #tpu.memory_space<vmem>>, vector<1x32xf32>
    %c6 = arith.constant 6 : index
    %c0_11 = arith.constant 0 : index
    %10 = vector.load %arg5[%c6, %c0_11] : memref<16x128xf32, #tpu.memory_space<vmem>>, vector<1x32xf32>
    %c7 = arith.constant 7 : index
    %c0_12 = arith.constant 0 : index
    %11 = vector.load %arg5[%c7, %c0_12] : memref<16x128xf32, #tpu.memory_space<vmem>>, vector<1x32xf32>
    %c8 = arith.constant 8 : index
    %c0_13 = arith.constant 0 : index
    %12 = vector.load %arg5[%c8, %c0_13] : memref<16x128xf32, #tpu.memory_space<vmem>>, vector<1x32xf32>
    %c9 = arith.constant 9 : index
    %c0_14 = arith.constant 0 : index
    %13 = vector.load %arg5[%c9, %c0_14] : memref<16x128xf32, #tpu.memory_space<vmem>>, vector<1x1xf32>
    %c0_15 = arith.constant 0 : index
    %c0_16 = arith.constant 0 : index
    %c0_17 = arith.constant 0 : index
    %14 = vector.load %arg1[%c0_15, %c0_16, %c0_17] : memref<2x8x32xf32, #tpu.memory_space<vmem>>, vector<2x8x32xf32>
    %c0_18 = arith.constant 0 : index
    %c0_19 = arith.constant 0 : index
    %15 = vector.load %arg3[%c0_18, %c0_19] : memref<8x32xf32, #tpu.memory_space<vmem>>, vector<8x32xf32>
    %16 = vector.shape_cast %15 : vector<8x32xf32> to vector<1x8x32xf32>
    %17 = vector.broadcast %16 : vector<1x8x32xf32> to vector<2x8x32xf32>
    %18 = arith.addf %14, %17 : vector<2x8x32xf32>
    %19 = vector.shape_cast %18 : vector<2x8x32xf32> to vector<16x32xf32>
    %c0_20 = arith.constant 0 : index
    %c0_21 = arith.constant 0 : index
    %c0_22 = arith.constant 0 : index
    %20 = vector.load %arg2[%c0_20, %c0_21, %c0_22] : memref<2x1x8xf32, #tpu.memory_space<vmem>>, vector<2x1x8xf32>
    %cst = arith.constant 5.000000e-01 : f32
    %21 = vector.broadcast %cst : f32 to vector<2x1x8xf32>
    %22 = arith.cmpf ogt, %20, %21 : vector<2x1x8xf32>
    %cst_23 = arith.constant -1.000000e+30 : f32
    %cst_24 = arith.constant 0.000000e+00 : f32
    %23 = vector.broadcast %cst_23 : f32 to vector<2x1x8xf32>
    %24 = vector.broadcast %cst_24 : f32 to vector<2x1x8xf32>
    %25 = arith.select %22, %23, %24 : vector<2x1x8xi1>, vector<2x1x8xf32>
    %26 = arith.truncf %19 : vector<16x32xf32> to vector<16x32xbf16>
    %cst_25 = arith.constant dense<0.000000e+00> : vector<16x96xf32>
    %27 = tpu.matmul %26, %0, %cst_25 {dimension_numbers = #tpu.dot_dimension_numbers<[1], [0], [0], [1], [0, 0, 1, 1], [], []>} : vector<16x32xbf16>, vector<32x96xbf16>, vector<16x96xf32> -> vector<16x96xf32>
    %28 = vector.broadcast %4 : vector<1x96xf32> to vector<16x96xf32>
    %29 = arith.addf %27, %28 : vector<16x96xf32>
    %30 = vector.extract_strided_slice %29 {offsets = [0, 0], sizes = [16, 16], strides = [1, 1]} : vector<16x96xf32> to vector<16x16xf32>
    %31 = vector.shape_cast %30 : vector<16x16xf32> to vector<2x8x16xf32>
    %32 = arith.truncf %31 : vector<2x8x16xf32> to vector<2x8x16xbf16>
    %33 = vector.extract_strided_slice %29 {offsets = [0, 32], sizes = [16, 16], strides = [1, 1]} : vector<16x96xf32> to vector<16x16xf32>
    %34 = vector.shape_cast %33 : vector<16x16xf32> to vector<2x8x16xf32>
    %35 = arith.truncf %34 : vector<2x8x16xf32> to vector<2x8x16xbf16>
    %36 = vector.extract_strided_slice %29 {offsets = [0, 64], sizes = [16, 16], strides = [1, 1]} : vector<16x96xf32> to vector<16x16xf32>
    %37 = vector.shape_cast %36 : vector<16x16xf32> to vector<2x8x16xf32>
    %38 = arith.truncf %37 : vector<2x8x16xf32> to vector<2x8x16xbf16>
    "tpu.trace_start"() <{level = 10 : i32, message = "bqd,bkd->bqk"}> : () -> ()
    %cst_26 = arith.constant dense<0.000000e+00> : vector<2x8x8xf32>
    %39 = tpu.matmul %32, %35, %cst_26 {dimension_numbers = #tpu.dot_dimension_numbers<[2], [2], [1], [1], [0, 0, 0, 1, 1, 1], [0], [0]>} : vector<2x8x16xbf16>, vector<2x8x16xbf16>, vector<2x8x8xf32> -> vector<2x8x8xf32>
    "tpu.trace_stop"() : () -> ()
    %40 = vector.broadcast %25 : vector<2x1x8xf32> to vector<2x8x8xf32>
    %41 = arith.addf %39, %40 : vector<2x8x8xf32>
    %cst_27 = arith.constant dense<0xFF800000> : vector<2x8xf32>
    %42 = vector.multi_reduction <maximumf>, %41, %cst_27 [2] : vector<2x8x8xf32> to vector<2x8xf32>
    %43 = vector.shape_cast %42 : vector<2x8xf32> to vector<2x8x1xf32>
    %44 = vector.broadcast %43 : vector<2x8x1xf32> to vector<2x8x8xf32>
    %45 = arith.subf %41, %44 : vector<2x8x8xf32>
    %46 = math.exp %45 : vector<2x8x8xf32>
    %cst_28 = arith.constant dense<0.000000e+00> : vector<2x8xf32>
    %47 = vector.multi_reduction <add>, %46, %cst_28 [2] : vector<2x8x8xf32> to vector<2x8xf32>
    %48 = vector.shape_cast %47 : vector<2x8xf32> to vector<2x8x1xf32>
    %49 = tpu.reciprocal %48 {approx = true} : vector<2x8x1xf32> -> vector<2x8x1xf32>
    %50 = vector.broadcast %49 : vector<2x8x1xf32> to vector<2x8x8xf32>
    %51 = arith.mulf %46, %50 : vector<2x8x8xf32>
    %52 = arith.truncf %51 : vector<2x8x8xf32> to vector<2x8x8xbf16>
    "tpu.trace_start"() <{level = 10 : i32, message = "bqk,bkd->bqd"}> : () -> ()
    %cst_29 = arith.constant dense<0.000000e+00> : vector<2x8x16xf32>
    %53 = tpu.matmul %52, %38, %cst_29 {dimension_numbers = #tpu.dot_dimension_numbers<[2], [1], [1], [2], [0, 0, 0, 1, 1, 2], [0], [0]>} : vector<2x8x8xbf16>, vector<2x8x16xbf16>, vector<2x8x16xf32> -> vector<2x8x16xf32>
    "tpu.trace_stop"() : () -> ()
    %54 = vector.extract_strided_slice %29 {offsets = [0, 16], sizes = [16, 16], strides = [1, 1]} : vector<16x96xf32> to vector<16x16xf32>
    %55 = vector.shape_cast %54 : vector<16x16xf32> to vector<2x8x16xf32>
    %56 = arith.truncf %55 : vector<2x8x16xf32> to vector<2x8x16xbf16>
    %57 = vector.extract_strided_slice %29 {offsets = [0, 48], sizes = [16, 16], strides = [1, 1]} : vector<16x96xf32> to vector<16x16xf32>
    %58 = vector.shape_cast %57 : vector<16x16xf32> to vector<2x8x16xf32>
    %59 = arith.truncf %58 : vector<2x8x16xf32> to vector<2x8x16xbf16>
    %60 = vector.extract_strided_slice %29 {offsets = [0, 80], sizes = [16, 16], strides = [1, 1]} : vector<16x96xf32> to vector<16x16xf32>
    %61 = vector.shape_cast %60 : vector<16x16xf32> to vector<2x8x16xf32>
    %62 = arith.truncf %61 : vector<2x8x16xf32> to vector<2x8x16xbf16>
    "tpu.trace_start"() <{level = 10 : i32, message = "bqd,bkd->bqk"}> : () -> ()
    %cst_30 = arith.constant dense<0.000000e+00> : vector<2x8x8xf32>
    %63 = tpu.matmul %56, %59, %cst_30 {dimension_numbers = #tpu.dot_dimension_numbers<[2], [2], [1], [1], [0, 0, 0, 1, 1, 1], [0], [0]>} : vector<2x8x16xbf16>, vector<2x8x16xbf16>, vector<2x8x8xf32> -> vector<2x8x8xf32>
    "tpu.trace_stop"() : () -> ()
    %64 = vector.broadcast %25 : vector<2x1x8xf32> to vector<2x8x8xf32>
    %65 = arith.addf %63, %64 : vector<2x8x8xf32>
    %cst_31 = arith.constant dense<0xFF800000> : vector<2x8xf32>
    %66 = vector.multi_reduction <maximumf>, %65, %cst_31 [2] : vector<2x8x8xf32> to vector<2x8xf32>
    %67 = vector.shape_cast %66 : vector<2x8xf32> to vector<2x8x1xf32>
    %68 = vector.broadcast %67 : vector<2x8x1xf32> to vector<2x8x8xf32>
    %69 = arith.subf %65, %68 : vector<2x8x8xf32>
    %70 = math.exp %69 : vector<2x8x8xf32>
    %cst_32 = arith.constant dense<0.000000e+00> : vector<2x8xf32>
    %71 = vector.multi_reduction <add>, %70, %cst_32 [2] : vector<2x8x8xf32> to vector<2x8xf32>
    %72 = vector.shape_cast %71 : vector<2x8xf32> to vector<2x8x1xf32>
    %73 = tpu.reciprocal %72 {approx = true} : vector<2x8x1xf32> -> vector<2x8x1xf32>
    %74 = vector.broadcast %73 : vector<2x8x1xf32> to vector<2x8x8xf32>
    %75 = arith.mulf %70, %74 : vector<2x8x8xf32>
    %76 = arith.truncf %75 : vector<2x8x8xf32> to vector<2x8x8xbf16>
    "tpu.trace_start"() <{level = 10 : i32, message = "bqk,bkd->bqd"}> : () -> ()
    %cst_33 = arith.constant dense<0.000000e+00> : vector<2x8x16xf32>
    %77 = tpu.matmul %76, %62, %cst_33 {dimension_numbers = #tpu.dot_dimension_numbers<[2], [1], [1], [2], [0, 0, 0, 1, 1, 2], [0], [0]>} : vector<2x8x8xbf16>, vector<2x8x16xbf16>, vector<2x8x16xf32> -> vector<2x8x16xf32>
    "tpu.trace_stop"() : () -> ()
    %78 = tpu.concatenate %53, %77 in 2 : vector<2x8x16xf32>, vector<2x8x16xf32> -> vector<2x8x32xf32>
    %79 = vector.shape_cast %78 : vector<2x8x32xf32> to vector<16x32xf32>
    %80 = arith.truncf %79 : vector<16x32xf32> to vector<16x32xbf16>
    %cst_34 = arith.constant dense<0.000000e+00> : vector<16x32xf32>
    %81 = tpu.matmul %80, %1, %cst_34 {dimension_numbers = #tpu.dot_dimension_numbers<[1], [0], [0], [1], [0, 0, 1, 1], [], []>} : vector<16x32xbf16>, vector<32x32xbf16>, vector<16x32xf32> -> vector<16x32xf32>
    %82 = vector.broadcast %5 : vector<1x32xf32> to vector<16x32xf32>
    %83 = arith.addf %81, %82 : vector<16x32xf32>
    %84 = arith.addf %19, %83 : vector<16x32xf32>
    %cst_35 = arith.constant dense<0.000000e+00> : vector<16xf32>
    %85 = vector.multi_reduction <add>, %84, %cst_35 [1] : vector<16x32xf32> to vector<16xf32>
    %86 = vector.shape_cast %85 : vector<16xf32> to vector<16x1xf32>
    %cst_36 = arith.constant 3.200000e+01 : f32
    %87 = vector.broadcast %cst_36 : f32 to vector<16x1xf32>
    %88 = arith.divf %86, %87 : vector<16x1xf32>
    %89 = vector.broadcast %88 : vector<16x1xf32> to vector<16x32xf32>
    %90 = arith.subf %84, %89 : vector<16x32xf32>
    %91 = arith.mulf %90, %90 : vector<16x32xf32>
    %cst_37 = arith.constant dense<0.000000e+00> : vector<16xf32>
    %92 = vector.multi_reduction <add>, %91, %cst_37 [1] : vector<16x32xf32> to vector<16xf32>
    %93 = vector.shape_cast %92 : vector<16xf32> to vector<16x1xf32>
    %cst_38 = arith.constant 3.200000e+01 : f32
    %94 = vector.broadcast %cst_38 : f32 to vector<16x1xf32>
    %95 = arith.divf %93, %94 : vector<16x1xf32>
    %96 = vector.broadcast %88 : vector<16x1xf32> to vector<16x32xf32>
    %97 = arith.subf %84, %96 : vector<16x32xf32>
    %cst_39 = arith.constant 9.99999974E-6 : f32
    %98 = vector.broadcast %cst_39 : f32 to vector<16x1xf32>
    %99 = arith.addf %95, %98 : vector<16x1xf32>
    %100 = math.rsqrt %99 : vector<16x1xf32>
    %101 = vector.broadcast %100 : vector<16x1xf32> to vector<16x32xf32>
    %102 = arith.mulf %97, %101 : vector<16x32xf32>
    %103 = vector.broadcast %6 : vector<1x32xf32> to vector<16x32xf32>
    %104 = arith.mulf %102, %103 : vector<16x32xf32>
    %105 = vector.broadcast %7 : vector<1x32xf32> to vector<16x32xf32>
    %106 = arith.addf %104, %105 : vector<16x32xf32>
    %107 = arith.truncf %106 : vector<16x32xf32> to vector<16x32xbf16>
    %cst_40 = arith.constant dense<0.000000e+00> : vector<16x64xf32>
    %108 = tpu.matmul %107, %2, %cst_40 {dimension_numbers = #tpu.dot_dimension_numbers<[1], [0], [0], [1], [0, 0, 1, 1], [], []>} : vector<16x32xbf16>, vector<32x64xbf16>, vector<16x64xf32> -> vector<16x64xf32>
    %109 = vector.broadcast %8 : vector<1x64xf32> to vector<16x64xf32>
    %110 = arith.addf %108, %109 : vector<16x64xf32>
    %cst_41 = arith.constant 0.000000e+00 : f32
    %111 = vector.broadcast %cst_41 : f32 to vector<16x64xf32>
    %112 = arith.maximumf %110, %111 : vector<16x64xf32>
    %113 = arith.truncf %112 : vector<16x64xf32> to vector<16x64xbf16>
    %cst_42 = arith.constant dense<0.000000e+00> : vector<16x32xf32>
    %114 = tpu.matmul %113, %3, %cst_42 {dimension_numbers = #tpu.dot_dimension_numbers<[1], [0], [0], [1], [0, 0, 1, 1], [], []>} : vector<16x64xbf16>, vector<64x32xbf16>, vector<16x32xf32> -> vector<16x32xf32>
    %115 = vector.broadcast %9 : vector<1x32xf32> to vector<16x32xf32>
    %116 = arith.addf %114, %115 : vector<16x32xf32>
    %117 = arith.addf %106, %116 : vector<16x32xf32>
    %cst_43 = arith.constant dense<0.000000e+00> : vector<16xf32>
    %118 = vector.multi_reduction <add>, %117, %cst_43 [1] : vector<16x32xf32> to vector<16xf32>
    %119 = vector.shape_cast %118 : vector<16xf32> to vector<16x1xf32>
    %cst_44 = arith.constant 3.200000e+01 : f32
    %120 = vector.broadcast %cst_44 : f32 to vector<16x1xf32>
    %121 = arith.divf %119, %120 : vector<16x1xf32>
    %122 = vector.broadcast %121 : vector<16x1xf32> to vector<16x32xf32>
    %123 = arith.subf %117, %122 : vector<16x32xf32>
    %124 = arith.mulf %123, %123 : vector<16x32xf32>
    %cst_45 = arith.constant dense<0.000000e+00> : vector<16xf32>
    %125 = vector.multi_reduction <add>, %124, %cst_45 [1] : vector<16x32xf32> to vector<16xf32>
    %126 = vector.shape_cast %125 : vector<16xf32> to vector<16x1xf32>
    %cst_46 = arith.constant 3.200000e+01 : f32
    %127 = vector.broadcast %cst_46 : f32 to vector<16x1xf32>
    %128 = arith.divf %126, %127 : vector<16x1xf32>
    %129 = vector.broadcast %121 : vector<16x1xf32> to vector<16x32xf32>
    %130 = arith.subf %117, %129 : vector<16x32xf32>
    %cst_47 = arith.constant 9.99999974E-6 : f32
    %131 = vector.broadcast %cst_47 : f32 to vector<16x1xf32>
    %132 = arith.addf %128, %131 : vector<16x1xf32>
    %133 = math.rsqrt %132 : vector<16x1xf32>
    %134 = vector.broadcast %133 : vector<16x1xf32> to vector<16x32xf32>
    %135 = arith.mulf %130, %134 : vector<16x32xf32>
    %136 = vector.broadcast %10 : vector<1x32xf32> to vector<16x32xf32>
    %137 = arith.mulf %135, %136 : vector<16x32xf32>
    %138 = vector.broadcast %11 : vector<1x32xf32> to vector<16x32xf32>
    %139 = arith.addf %137, %138 : vector<16x32xf32>
    %140 = vector.shape_cast %139 : vector<16x32xf32> to vector<2x8x32xf32>
    %cst_48 = arith.constant dense<0.000000e+00> : vector<2x32xf32>
    %141 = vector.multi_reduction <add>, %140, %cst_48 [1] : vector<2x8x32xf32> to vector<2x32xf32>
    %cst_49 = arith.constant 8.000000e+00 : f32
    %142 = vector.broadcast %cst_49 : f32 to vector<2x32xf32>
    %143 = arith.divf %141, %142 : vector<2x32xf32>
    %144 = vector.broadcast %12 : vector<1x32xf32> to vector<2x32xf32>
    %145 = arith.mulf %143, %144 : vector<2x32xf32>
    %cst_50 = arith.constant dense<0.000000e+00> : vector<2xf32>
    %146 = vector.multi_reduction <add>, %145, %cst_50 [1] : vector<2x32xf32> to vector<2xf32>
    %147 = vector.shape_cast %146 : vector<2xf32> to vector<2x1xf32>
    %148 = vector.broadcast %13 : vector<1x1xf32> to vector<2x1xf32>
    %149 = arith.addf %147, %148 : vector<2x1xf32>
    %150 = arith.negf %149 : vector<2x1xf32>
    %151 = math.exp %150 : vector<2x1xf32>
    %cst_51 = arith.constant 1.000000e+00 : f32
    %152 = vector.broadcast %cst_51 : f32 to vector<2x1xf32>
    %153 = arith.addf %152, %151 : vector<2x1xf32>
    %154 = arith.divf %152, %153 : vector<2x1xf32>
    %c0_52 = arith.constant 0 : index
    %c0_53 = arith.constant 0 : index
    %155 = vector.load %arg6[%c0_52, %c0_53] : memref<2x1xf32, #tpu.memory_space<vmem>>, vector<2x1xf32>
    tpu.vector_store %arg6[%c0_52, %c0_53], %154 {strides = array<i32>} : memref<2x1xf32, #tpu.memory_space<vmem>>, vector<2x1xf32>,
    return
  }
  func.func @transform_0(%arg0: i32) -> (i32, i32, i32) {
    %c0_i32 = arith.constant 0 : i32
    %c0_i32_0 = arith.constant 0 : i32
    %c0_i32_1 = arith.constant 0 : i32
    return %arg0, %c0_i32, %c0_i32_0 : i32, i32, i32
  }
  func.func @transform_1(%arg0: i32) -> (i32, i32, i32) {
    %c0_i32 = arith.constant 0 : i32
    %c0_i32_0 = arith.constant 0 : i32
    %c0_i32_1 = arith.constant 0 : i32
    return %arg0, %c0_i32, %c0_i32_0 : i32, i32, i32
  }
  func.func @transform_2(%arg0: i32) -> (i32, i32) {
    %c0_i32 = arith.constant 0 : i32
    %c0_i32_0 = arith.constant 0 : i32
    %c0_i32_1 = arith.constant 0 : i32
    return %c0_i32, %c0_i32_0 : i32, i32
  }
  func.func @transform_3(%arg0: i32) -> (i32, i32) {
    %c0_i32 = arith.constant 0 : i32
    %c0_i32_0 = arith.constant 0 : i32
    %c0_i32_1 = arith.constant 0 : i32
    return %c0_i32, %c0_i32_0 : i32, i32
  }
  func.func @transform_4(%arg0: i32) -> (i32, i32) {
    %c0_i32 = arith.constant 0 : i32
    %c0_i32_0 = arith.constant 0 : i32
    %c0_i32_1 = arith.constant 0 : i32
    return %c0_i32, %c0_i32_0 : i32, i32
  }
  func.func @transform_5(%arg0: i32) -> (i32, i32) {
    %c0_i32 = arith.constant 0 : i32
    %c0_i32_0 = arith.constant 0 : i32
    return %arg0, %c0_i32 : i32, i32
  }
}

</mosaic_0001>

<llo_original>
// kernel: tpu_custom_call.1
$region0: #{tpu_custom_call.1}
  #allocation0 [shape = 'u32[]', space=smem, size = 0x4, offset = 0x4, fixed_abs, tag = 'smem constant byte address 0x4 - core index']
  #allocation1 [shape = 'u32[144,128]{1,0:T(1,128)}', space=vmem, size = 0x12000, scoped, tag = 'internal scratch']
  %s0 = inlined_call_operand.hbm [shape: f32[2,8,32], index: 0, kind: input, shape index: {}]
  %s1 = inlined_call_operand.vmem [shape: f32[2,1,8], index: 1, kind: input, shape index: {}]
  %s2 = inlined_call_operand.hbm [shape: f32[8,32], index: 2, kind: input, shape index: {}]
  %s3 = inlined_call_operand.hbm [shape: bf16[64,512], index: 3, kind: input, shape index: {}]
  %s4 = inlined_call_operand.hbm [shape: f32[16,128], index: 4, kind: input, shape index: {}]
  %s5 = inlined_call_operand.vmem [shape: f32[2,1], index: 5, kind: output, shape index: {}]
  %s6 = sld [smem:[#allocation0]]
  $region46: #{tpu_custom_call.1} parent=0
    _
  %s8 = ssub.s32 1, %s6
  %s9 = scalar_select 0, %s8, %s6
  $region1: #{tpu_custom_call.1} parent=0
    #allocation2 [shape = 'u8[8192]{0}', space=vmem, size = 0x2000, scoped, tag = 'input window, operand 0, single buffered']
    #allocation3 [shape = 's32[1]{0}', space=sflag, size = 0x4, scoped, tag = 'scoped memory for tpu_custom_call.1']
    #allocation4 [shape = 'u8[4096]{0}', space=vmem, size = 0x1000, scoped, tag = 'input window, operand 2, single buffered']
    #allocation5 [shape = 's32[1]{0}', space=sflag, size = 0x4, scoped, tag = 'scoped memory for tpu_custom_call.1']
    #allocation6 [shape = 'u8[65536]{0}', space=vmem, size = 0x10000, scoped, tag = 'input window, operand 3, single buffered']
    #allocation7 [shape = 'u8[8192]{0}', space=vmem, size = 0x2000, scoped, tag = 'input window, operand 4, single buffered']
    #allocation8 [shape = 's32[1]{0}', space=sflag, size = 0x4, scoped, tag = 'scoped memory for tpu_custom_call.1']
    %10 = vsyncpa [#allocation3], 0
    %11 = vsyncpa [#allocation5], 0
    %12 = vsyncpa [#allocation8], 0
    // Predicated region
    $region2: #{tpu_custom_call.1} parent=1 // pred_check
      _
    $region3: #{tpu_custom_call.1} parent=1 // pred_check_branch
      %14 = sbr.rel (0) target = $region5
    $region4: #{tpu_custom_call.1} parent=1 // pred_region
      %s16 = ssub.s32 256, 256
      %17 = vsyncadd [#allocation3], %s16
      %s18 = sshll.u32 [#allocation2], 4
      %s19 = int_to_ptr.vmem [resolvable:$true] %s18
      %24 = dma.hbm_to_vmem [thread:$0]  %s0, 256, %s19, [#allocation3], 128, 128, 8
    $region5: #{tpu_custom_call.1} parent=1 // pred_fallthru
      _
    // Predicated region
    $region6: #{tpu_custom_call.1} parent=1 // pred_check
      _
    $region7: #{tpu_custom_call.1} parent=1 // pred_check_branch
      %26 = sbr.rel (0) target = $region9
    $region8: #{tpu_custom_call.1} parent=1 // pred_region
      _
    $region9: #{tpu_custom_call.1} parent=1 // pred_fallthru
      _
    // Predicated region
    $region10: #{tpu_custom_call.1} parent=1 // pred_check
      _
    $region11: #{tpu_custom_call.1} parent=1 // pred_check_branch
      %28 = sbr.rel (0) target = $region13
    $region12: #{tpu_custom_call.1} parent=1 // pred_region
      %s30 = ssub.s32 128, 128
      %31 = vsyncadd [#allocation5], %s30
      %s33 = sshll.u32 [#allocation4], 4
      %s34 = int_to_ptr.vmem [resolvable:$true] %s33
      %36 = dma.hbm_to_vmem [thread:$0]  %s2, 128, %s34, [#allocation5]
    $region13: #{tpu_custom_call.1} parent=1 // pred_fallthru
      _
    // Predicated region
    $region14: #{tpu_custom_call.1} parent=1 // pred_check
      _
    $region15: #{tpu_custom_call.1} parent=1 // pred_check_branch
      %38 = sbr.rel (0) target = $region17
    $region16: #{tpu_custom_call.1} parent=1 // pred_region
      %s40 = ssub.s32 2048, 2048
      %41 = vsyncadd [#allocation5], %s40
      %s42 = sshll.u32 [#allocation6], 4
      %s43 = int_to_ptr.vmem [resolvable:$true] %s42
      %48 = dma.hbm_to_vmem [thread:$0]  %s3, 2048, %s43, [#allocation5], 256, 256, 16
    $region17: #{tpu_custom_call.1} parent=1 // pred_fallthru
      _
    // Predicated region
    $region18: #{tpu_custom_call.1} parent=1 // pred_check
      _
    $region19: #{tpu_custom_call.1} parent=1 // pred_check_branch
      %50 = sbr.rel (0) target = $region21
    $region20: #{tpu_custom_call.1} parent=1 // pred_region
      %s52 = ssub.s32 256, 256
      %53 = vsyncadd [#allocation8], %s52
      %s54 = sshll.u32 [#allocation7], 4
      %s55 = int_to_ptr.vmem [resolvable:$true] %s54
      %60 = dma.hbm_to_vmem [thread:$0]  %s4, 256, %s55, [#allocation8], 128, 128, 8
    $region21: #{tpu_custom_call.1} parent=1 // pred_fallthru
      _
    // Predicated region
    $region22: #{tpu_custom_call.1} parent=1 // pred_check
      _
    $region23: #{tpu_custom_call.1} parent=1 // pred_check_branch
      %62 = sbr.rel (0) target = $region25
    $region24: #{tpu_custom_call.1} parent=1 // pred_region
      %63 = dma.done [#allocation3], 256
    $region25: #{tpu_custom_call.1} parent=1 // pred_fallthru
      _
    // Predicated region
    $region26: #{tpu_custom_call.1} parent=1 // pred_check
      _
    $region27: #{tpu_custom_call.1} parent=1 // pred_check_branch
      %65 = sbr.rel (0) target = $region29
    $region28: #{tpu_custom_call.1} parent=1 // pred_region
      %66 = dma.done [#allocation5], 128
    $region29: #{tpu_custom_call.1} parent=1 // pred_fallthru
      _
    // Predicated region
    $region30: #{tpu_custom_call.1} parent=1 // pred_check
      _
    $region31: #{tpu_custom_call.1} parent=1 // pred_check_branch
      %68 = sbr.rel (0) target = $region33
    $region32: #{tpu_custom_call.1} parent=1 // pred_region
      %69 = dma.done [#allocation5], 2048
    $region33: #{tpu_custom_call.1} parent=1 // pred_fallthru
      _
    // Predicated region
    $region34: #{tpu_custom_call.1} parent=1 // pred_check
      _
    $region35: #{tpu_custom_call.1} parent=1 // pred_check_branch
      %71 = sbr.rel (0) target = $region37
    $region36: #{tpu_custom_call.1} parent=1 // pred_region
      %72 = dma.done [#allocation8], 256
    $region37: #{tpu_custom_call.1} parent=1 // pred_fallthru
      _
    %v74 = vld [vmem:[#allocation6] sm:$0xf]
    %v75 = vld [vmem:[#allocation6 + $0x10] sm:$0xf]
    %v76 = vld [vmem:[#allocation6 + $0x20] sm:$0xf]
    %v77 = vld [vmem:[#allocation6 + $0x30] sm:$0xf]
    %v78 = vld [vmem:[#allocation6 + $0x4] sm:$0xf]
    %v79 = vld [vmem:[#allocation6 + $0x14] sm:$0xf]
    %v80 = vld [vmem:[#allocation6 + $0x24] sm:$0xf]
    %v81 = vld [vmem:[#allocation6 + $0x34] sm:$0xf]
    %v82 = vld [vmem:[#allocation6 + $0x8] sm:$0xf]
    %v83 = vld [vmem:[#allocation6 + $0x18] sm:$0xf]
    %v84 = vld [vmem:[#allocation6 + $0x28] sm:$0xf]
    %v85 = vld [vmem:[#allocation6 + $0x38] sm:$0xf]
    %v86 = vld [vmem:[#allocation6 + $0xc] sm:$0xf]
    %v87 = vld [vmem:[#allocation6 + $0x1c] sm:$0xf]
    %v88 = vld [vmem:[#allocation6 + $0x2c] sm:$0xf]
    %v89 = vld [vmem:[#allocation6 + $0x3c] sm:$0xf]
    %v90 = vld [vmem:[#allocation6 + $0x4c] sm:$0xf]
    %v91 = vld [vmem:[#allocation6 + $0x5c] sm:$0xf]
    %v92 = vld [vmem:[#allocation6 + $0x6c] sm:$0xf]
    %v93 = vld [vmem:[#allocation6 + $0x7c] sm:$0xf]
    %v94 = vld [vmem:[#allocation7] sm:$0x1]
    %v95 = vld [vmem:[#allocation7 + $0x1] sm:$0x1]
    %v96 = vld [vmem:[#allocation7 + $0x2] sm:$0x1]
    %v97 = vld [vmem:[#allocation7 + $0x3] sm:$0x1]
    %v98 = vld [vmem:[#allocation7 + $0x4] sm:$0x1]
    %v99 = vld [vmem:[#allocation7 + $0x5] sm:$0x1]
    %v100 = vld [vmem:[#allocation7 + $0x6] sm:$0x1]
    %v101 = vld [vmem:[#allocation7 + $0x7] sm:$0x1]
    %v102 = vld [vmem:[#allocation7 + $0x8] sm:$0x1]
    %v103 = vld [vmem:[#allocation7 + $0x9] sm:$0x1]
    %v104 = vld [vmem:[#allocation2] sm:$0xff]
    %v105 = vld [vmem:[#allocation2 + $0x8] sm:$0xff]
    %v106 = vld [vmem:[#allocation4] sm:$0xff]
    %v107 = vadd.f32 %v104, %v106
    %v108 = vadd.f32 %v105, %v106
    %v109 = vld [vmem:[%s1] sm:$0x1]
    %v110 = vld [vmem:[%s1 + $0x1] sm:$0x1]
    %vm111 = vcmp.gt.f32.partialorder %v109, 0.5
    %vm112 = vcmp.gt.f32.partialorder %v110, 0.5
    %v113 = vsel %vm111, -1e+30, 0.0
    %v114 = vsel %vm112, -1e+30, 0.0
    %v115 = vpack.c.bf16 %v108, %v107
    %v116 = vlaneseq
    %v117 = vshrl.u32 %v116, 7
    %v118 = vsub.s32 0, %v117
    %v119 = vrot.slane %v94, %v118
    %v124 = vunpack.c.l.b16 %v74
    %v125 = vunpack.c.l.b16 %v75
    %v126 = vunpack.c.l.b16 %v76
    %v127 = vunpack.c.l.b16 %v77
    %v128 = vpack.c.b16 %v125, %v124
    %v129 = vpack.c.b16 %v127, %v126
    %vm132 = vcmask 261120
    %v134 = vsel %vm132, %v115, 0
    %136 = vmatprep.subr.bf16.mxu0 0
    %137 = vmatpush1.bf16.msra.mxu0 %v128
    %138 = vmatprep.subr.bf16.mxu0 0
    %139 = vmatpush1.bf16.msra.mxu0 %v129
    %140 = vmatprep.subr.bf16.mxu0 0
    %141 = vmatpush1.bf16.msra.mxu0 0
    %142 = vmatprep.subr.bf16.mxu0 0
    %143 = vmatpush1.bf16.msra.mxu0 0
    %144 = vmatprep.subr.bf16.mxu0 0
    %145 = vmatpush1.bf16.msra.mxu0 0
    %146 = vmatprep.subr.bf16.mxu0 0
    %147 = vmatpush1.bf16.msra.mxu0 0
    %148 = vmatprep.subr.bf16.mxu0 0
    %149 = vmatpush1.bf16.msra.mxu0 0
    %150 = vmatprep.subr.bf16.mxu0 0
    %151 = vmatpush1.bf16.msra.mxu0 0
    %152 = vmatprep.subr.bf16.mxu0 0
    %153 = vmatpush1.bf16.msra.mxu0 0
    %154 = vmatprep.subr.bf16.mxu0 0
    %155 = vmatpush1.bf16.msra.mxu0 0
    %156 = vmatprep.subr.bf16.mxu0 0
    %157 = vmatpush1.bf16.msra.mxu0 0
    %158 = vmatprep.subr.bf16.mxu0 0
    %159 = vmatpush1.bf16.msra.mxu0 0
    %160 = vmatprep.subr.bf16.mxu0 0
    %161 = vmatpush1.bf16.msra.mxu0 0
    %162 = vmatprep.subr.bf16.mxu0 0
    %163 = vmatpush1.bf16.msra.mxu0 0
    %164 = vmatprep.subr.bf16.mxu0 0
    %165 = vmatpush1.bf16.msra.mxu0 0
    %166 = vmatprep.subr.bf16.mxu0 0
    %167 = vmatpush1.bf16.msra.mxu0 0
    %168 = vmatprep.mubr.bf16.mxu0 0
    %169 = vmatmul.mubr.bf16.gmra.mrb[0].mxu0 %v134
    %v170 = vpop.f32.mrb[0].mxu0
    %v171 = vadd.f32 %v119, %v170
    %v172 = vpop.f32.mrb[0].mxu0
    %v173 = vpop.f32.mrb[0].mxu0
    %v174 = vadd.f32 %v119, %v173
    %v175 = vpop.f32.mrb[0].mxu0
    %176 = vdwg.mxu0
    %v177 = vpack.c.bf16 %v171, %v171
    %v178 = vpack.c.bf16 %v174, %v174
    %v181 = vlaneseq
    %v182 = vshrl.u32 %v181, 7
    %v183 = vsub.s32 0, %v182
    %v184 = vrot.slane %v113, %v183
    %v185 = vlaneseq
    %v186 = vshrl.u32 %v185, 7
    %v187 = vsub.s32 0, %v186
    %v188 = vrot.slane %v114, %v187
    %192 = vrot.lane.b32.xlu0 %v177, 96
    %v193 = vpop.permute.xlu0 %192
    %vm194 = vcmask 130048
    %v196 = vsel %vm194, %v177, 0
    %v199 = vsel %vm194, %v193, 0
    %201 = vmatprep.subr.bf16.mxu0 0
    %202 = vmatpush1.bf16.xpose.msra.mxu0 %v199
    %203 = vmatprep.subr.bf16.mxu0 0
    %204 = vmatpush1.bf16.xpose.msra.mxu0 0
    %205 = vmatprep.subr.bf16.mxu0 0
    %206 = vmatpush1.bf16.xpose.msra.mxu0 0
    %207 = vmatprep.subr.bf16.mxu0 0
    %208 = vmatpush1.bf16.xpose.msra.mxu0 0
    %209 = vmatprep.subr.bf16.mxu0 0
    %210 = vmatpush1.bf16.xpose.msra.mxu0 0
    %211 = vmatprep.subr.bf16.mxu0 0
    %212 = vmatpush1.bf16.xpose.msra.mxu0 0
    %213 = vmatprep.subr.bf16.mxu0 0
    %214 = vmatpush1.bf16.xpose.msra.mxu0 0
    %215 = vmatprep.subr.bf16.mxu0 0
    %216 = vmatpush1.bf16.xpose.msra.mxu0 0
    %217 = vmatprep.subr.bf16.mxu0 0
    %218 = vmatpush1.bf16.xpose.msra.mxu0 0
    %219 = vmatprep.subr.bf16.mxu0 0
    %220 = vmatpush1.bf16.xpose.msra.mxu0 0
    %221 = vmatprep.subr.bf16.mxu0 0
    %222 = vmatpush1.bf16.xpose.msra.mxu0 0
    %223 = vmatprep.subr.bf16.mxu0 0
    %224 = vmatpush1.bf16.xpose.msra.mxu0 0
    %225 = vmatprep.subr.bf16.mxu0 0
    %226 = vmatpush1.bf16.xpose.msra.mxu0 0
    %227 = vmatprep.subr.bf16.mxu0 0
    %228 = vmatpush1.bf16.xpose.msra.mxu0 0
    %229 = vmatprep.subr.bf16.mxu0 0
    %230 = vmatpush1.bf16.xpose.msra.mxu0 0
    %231 = vmatprep.subr.bf16.mxu0 0
    %232 = vmatpush1.bf16.xpose.msra.mxu0 0
    %233 = vmatprep.mubr.bf16.mxu0 0
    %234 = vmatmul.mubr.bf16.gmra.mrb[0].mxu0 %v196
    %v235 = vpop.f32.mrb[0].mxu0
    %v236 = vadd.f32 %v184, %v235
    %v237 = vpop.f32.mrb[0].mxu0
    %v238 = vpop.f32.mrb[0].mxu0
    %v239 = vpop.f32.mrb[0].mxu0
    %240 = vdwg.mxu0
    %242 = vrot.lane.b32.xlu0 %v178, 96
    %v243 = vpop.permute.xlu0 %242
    %v245 = vsel %vm194, %v178, 0
    %v248 = vsel %vm194, %v243, 0
    %250 = vmatprep.subr.bf16.mxu0 0
    %251 = vmatpush1.bf16.xpose.msra.mxu0 %v248
    %252 = vmatprep.subr.bf16.mxu0 0
    %253 = vmatpush1.bf16.xpose.msra.mxu0 0
    %254 = vmatprep.subr.bf16.mxu0 0
    %255 = vmatpush1.bf16.xpose.msra.mxu0 0
    %256 = vmatprep.subr.bf16.mxu0 0
    %257 = vmatpush1.bf16.xpose.msra.mxu0 0
    %258 = vmatprep.subr.bf16.mxu0 0
    %259 = vmatpush1.bf16.xpose.msra.mxu0 0
    %260 = vmatprep.subr.bf16.mxu0 0
    %261 = vmatpush1.bf16.xpose.msra.mxu0 0
    %262 = vmatprep.subr.bf16.mxu0 0
    %263 = vmatpush1.bf16.xpose.msra.mxu0 0
    %264 = vmatprep.subr.bf16.mxu0 0
    %265 = vmatpush1.bf16.xpose.msra.mxu0 0
    %266 = vmatprep.subr.bf16.mxu0 0
    %267 = vmatpush1.bf16.xpose.msra.mxu0 0
    %268 = vmatprep.subr.bf16.mxu0 0
    %269 = vmatpush1.bf16.xpose.msra.mxu0 0
    %270 = vmatprep.subr.bf16.mxu0 0
    %271 = vmatpush1.bf16.xpose.msra.mxu0 0
    %272 = vmatprep.subr.bf16.mxu0 0
    %273 = vmatpush1.bf16.xpose.msra.mxu0 0
    %274 = vmatprep.subr.bf16.mxu0 0
    %275 = vmatpush1.bf16.xpose.msra.mxu0 0
    %276 = vmatprep.subr.bf16.mxu0 0
    %277 = vmatpush1.bf16.xpose.msra.mxu0 0
    %278 = vmatprep.subr.bf16.mxu0 0
    %279 = vmatpush1.bf16.xpose.msra.mxu0 0
    %280 = vmatprep.subr.bf16.mxu0 0
    %281 = vmatpush1.bf16.xpose.msra.mxu0 0
    %282 = vmatprep.mubr.bf16.mxu0 0
    %283 = vmatmul.mubr.bf16.gmra.mrb[0].mxu0 %v245
    %v284 = vpop.f32.mrb[0].mxu0
    %v285 = vadd.f32 %v188, %v284
    %v286 = vpop.f32.mrb[0].mxu0
    %v287 = vpop.f32.mrb[0].mxu0
    %v288 = vpop.f32.mrb[0].mxu0
    %289 = vdwg.mxu0
    %vm290 = vcmask 64512
    %v291 = vsel %vm290, %v236, -inf
    %292 = vmax.xlane.f32.xlu0 %v291
    %v293 = vpop.xlane.xlu0 %292
    %v294 = vsel %vm290, %v285, -inf
    %295 = vmax.xlane.f32.xlu0 %v294
    %v296 = vpop.xlane.xlu0 %295
    %v297 = vsub.f32 %v236, %v293
    %v298 = vsub.f32 %v285, %v296
    %v299 = vmul.f32 %v297, 1.442695
    %v300 = vpow.pop %v299
    %v301 = vmul.f32 %v298, 1.442695
    %v302 = vpow.pop %v301
    %v303 = vsel %vm290, %v300, 0.0
    %304 = vadd.xlane.f32.xlu0 %v303
    %v305 = vpop.xlane.xlu0 %304
    %v306 = vsel %vm290, %v302, 0.0
    %307 = vadd.xlane.f32.xlu0 %v306
    %v308 = vpop.xlane.xlu0 %307
    %v309 = vrcp.pop %v305
    %v310 = vrcp.pop %v308
    %v311 = vmul.f32 %v300, %v309
    %v312 = vmul.f32 %v302, %v310
    %v313 = vpack.c.bf16 %v311, %v311
    %v314 = vpack.c.bf16 %v312, %v312
    %315 = vrot.lane.b32.xlu0 %v177, 64
    %v316 = vpop.permute.xlu0 %315
    %v318 = vsel %vm290, %v313, 0
    %vm320 = vcmask 1043456
    %v322 = vsel %vm320, %v316, 0
    %324 = vmatprep.subr.bf16.mxu0 0
    %325 = vmatpush1.bf16.msra.mxu0 %v322
    %326 = vmatprep.subr.bf16.mxu0 0
    %327 = vmatpush1.bf16.msra.mxu0 0
    %328 = vmatprep.subr.bf16.mxu0 0
    %329 = vmatpush1.bf16.msra.mxu0 0
    %330 = vmatprep.subr.bf16.mxu0 0
    %331 = vmatpush1.bf16.msra.mxu0 0
    %332 = vmatprep.subr.bf16.mxu0 0
    %333 = vmatpush1.bf16.msra.mxu0 0
    %334 = vmatprep.subr.bf16.mxu0 0
    %335 = vmatpush1.bf16.msra.mxu0 0
    %336 = vmatprep.subr.bf16.mxu0 0
    %337 = vmatpush1.bf16.msra.mxu0 0
    %338 = vmatprep.subr.bf16.mxu0 0
    %339 = vmatpush1.bf16.msra.mxu0 0
    %340 = vmatprep.subr.bf16.mxu0 0
    %341 = vmatpush1.bf16.msra.mxu0 0
    %342 = vmatprep.subr.bf16.mxu0 0
    %343 = vmatpush1.bf16.msra.mxu0 0
    %344 = vmatprep.subr.bf16.mxu0 0
    %345 = vmatpush1.bf16.msra.mxu0 0
    %346 = vmatprep.subr.bf16.mxu0 0
    %347 = vmatpush1.bf16.msra.mxu0 0
    %348 = vmatprep.subr.bf16.mxu0 0
    %349 = vmatpush1.bf16.msra.mxu0 0
    %350 = vmatprep.subr.bf16.mxu0 0
    %351 = vmatpush1.bf16.msra.mxu0 0
    %352 = vmatprep.subr.bf16.mxu0 0
    %353 = vmatpush1.bf16.msra.mxu0 0
    %354 = vmatprep.subr.bf16.mxu0 0
    %355 = vmatpush1.bf16.msra.mxu0 0
    %356 = vmatprep.mubr.bf16.mxu0 0
    %357 = vmatmul.mubr.bf16.gmra.mrb[0].mxu0 %v318
    %v358 = vpop.f32.mrb[0].mxu0
    %v359 = vadd.f32 0.0, %v358
    %v360 = vpop.f32.mrb[0].mxu0
    %v361 = vpop.f32.mrb[0].mxu0
    %v362 = vpop.f32.mrb[0].mxu0
    %363 = vdwg.mxu0
    %364 = vrot.lane.b32.xlu0 %v178, 64
    %v365 = vpop.permute.xlu0 %364
    %v367 = vsel %vm290, %v314, 0
    %v370 = vsel %vm320, %v365, 0
    %372 = vmatprep.subr.bf16.mxu0 0
    %373 = vmatpush1.bf16.msra.mxu0 %v370
    %374 = vmatprep.subr.bf16.mxu0 0
    %375 = vmatpush1.bf16.msra.mxu0 0
    %376 = vmatprep.subr.bf16.mxu0 0
    %377 = vmatpush1.bf16.msra.mxu0 0
    %378 = vmatprep.subr.bf16.mxu0 0
    %379 = vmatpush1.bf16.msra.mxu0 0
    %380 = vmatprep.subr.bf16.mxu0 0
    %381 = vmatpush1.bf16.msra.mxu0 0
    %382 = vmatprep.subr.bf16.mxu0 0
    %383 = vmatpush1.bf16.msra.mxu0 0
    %384 = vmatprep.subr.bf16.mxu0 0
    %385 = vmatpush1.bf16.msra.mxu0 0
    %386 = vmatprep.subr.bf16.mxu0 0
    %387 = vmatpush1.bf16.msra.mxu0 0
    %388 = vmatprep.subr.bf16.mxu0 0
    %389 = vmatpush1.bf16.msra.mxu0 0
    %390 = vmatprep.subr.bf16.mxu0 0
    %391 = vmatpush1.bf16.msra.mxu0 0
    %392 = vmatprep.subr.bf16.mxu0 0
    %393 = vmatpush1.bf16.msra.mxu0 0
    %394 = vmatprep.subr.bf16.mxu0 0
    %395 = vmatpush1.bf16.msra.mxu0 0
    %396 = vmatprep.subr.bf16.mxu0 0
    %397 = vmatpush1.bf16.msra.mxu0 0
    %398 = vmatprep.subr.bf16.mxu0 0
    %399 = vmatpush1.bf16.msra.mxu0 0
    %400 = vmatprep.subr.bf16.mxu0 0
    %401 = vmatpush1.bf16.msra.mxu0 0
    %402 = vmatprep.subr.bf16.mxu0 0
    %403 = vmatpush1.bf16.msra.mxu0 0
    %404 = vmatprep.mubr.bf16.mxu0 0
    %405 = vmatmul.mubr.bf16.gmra.mrb[0].mxu0 %v367
    %v406 = vpop.f32.mrb[0].mxu0
    %v407 = vadd.f32 0.0, %v406
    %v408 = vpop.f32.mrb[0].mxu0
    %v409 = vpop.f32.mrb[0].mxu0
    %v410 = vpop.f32.mrb[0].mxu0
    %411 = vdwg.mxu0
    %412 = vrot.lane.b32.xlu0 %v177, 112
    %v413 = vpop.permute.xlu0 %412
    %414 = vrot.lane.b32.xlu0 %v177, 80
    %v415 = vpop.permute.xlu0 %414
    %v417 = vsel %vm194, %v413, 0
    %v420 = vsel %vm194, %v415, 0
    %422 = vmatprep.subr.bf16.mxu0 0
    %423 = vmatpush1.bf16.xpose.msra.mxu0 %v420
    %424 = vmatprep.subr.bf16.mxu0 0
    %425 = vmatpush1.bf16.xpose.msra.mxu0 0
    %426 = vmatprep.subr.bf16.mxu0 0
    %427 = vmatpush1.bf16.xpose.msra.mxu0 0
    %428 = vmatprep.subr.bf16.mxu0 0
    %429 = vmatpush1.bf16.xpose.msra.mxu0 0
    %430 = vmatprep.subr.bf16.mxu0 0
    %431 = vmatpush1.bf16.xpose.msra.mxu0 0
    %432 = vmatprep.subr.bf16.mxu0 0
    %433 = vmatpush1.bf16.xpose.msra.mxu0 0
    %434 = vmatprep.subr.bf16.mxu0 0
    %435 = vmatpush1.bf16.xpose.msra.mxu0 0
    %436 = vmatprep.subr.bf16.mxu0 0
    %437 = vmatpush1.bf16.xpose.msra.mxu0 0
    %438 = vmatprep.subr.bf16.mxu0 0
    %439 = vmatpush1.bf16.xpose.msra.mxu0 0
    %440 = vmatprep.subr.bf16.mxu0 0
    %441 = vmatpush1.bf16.xpose.msra.mxu0 0
    %442 = vmatprep.subr.bf16.mxu0 0
    %443 = vmatpush1.bf16.xpose.msra.mxu0 0
    %444 = vmatprep.subr.bf16.mxu0 0
    %445 = vmatpush1.bf16.xpose.msra.mxu0 0
    %446 = vmatprep.subr.bf16.mxu0 0
    %447 = vmatpush1.bf16.xpose.msra.mxu0 0
    %448 = vmatprep.subr.bf16.mxu0 0
    %449 = vmatpush1.bf16.xpose.msra.mxu0 0
    %450 = vmatprep.subr.bf16.mxu0 0
    %451 = vmatpush1.bf16.xpose.msra.mxu0 0
    %452 = vmatprep.subr.bf16.mxu0 0
    %453 = vmatpush1.bf16.xpose.msra.mxu0 0
    %454 = vmatprep.mubr.bf16.mxu0 0
    %455 = vmatmul.mubr.bf16.gmra.mrb[0].mxu0 %v417
    %v456 = vpop.f32.mrb[0].mxu0
    %v457 = vadd.f32 %v184, %v456
    %v458 = vpop.f32.mrb[0].mxu0
    %v459 = vpop.f32.mrb[0].mxu0
    %v460 = vpop.f32.mrb[0].mxu0
    %461 = vdwg.mxu0
    %462 = vrot.lane.b32.xlu0 %v178, 112
    %v463 = vpop.permute.xlu0 %462
    %464 = vrot.lane.b32.xlu0 %v178, 80
    %v465 = vpop.permute.xlu0 %464
    %v467 = vsel %vm194, %v463, 0
    %v470 = vsel %vm194, %v465, 0
    %472 = vmatprep.subr.bf16.mxu0 0
    %473 = vmatpush1.bf16.xpose.msra.mxu0 %v470
    %474 = vmatprep.subr.bf16.mxu0 0
    %475 = vmatpush1.bf16.xpose.msra.mxu0 0
    %476 = vmatprep.subr.bf16.mxu0 0
    %477 = vmatpush1.bf16.xpose.msra.mxu0 0
    %478 = vmatprep.subr.bf16.mxu0 0
    %479 = vmatpush1.bf16.xpose.msra.mxu0 0
    %480 = vmatprep.subr.bf16.mxu0 0
    %481 = vmatpush1.bf16.xpose.msra.mxu0 0
    %482 = vmatprep.subr.bf16.mxu0 0
    %483 = vmatpush1.bf16.xpose.msra.mxu0 0
    %484 = vmatprep.subr.bf16.mxu0 0
    %485 = vmatpush1.bf16.xpose.msra.mxu0 0
    %486 = vmatprep.subr.bf16.mxu0 0
    %487 = vmatpush1.bf16.xpose.msra.mxu0 0
    %488 = vmatprep.subr.bf16.mxu0 0
    %489 = vmatpush1.bf16.xpose.msra.mxu0 0
    %490 = vmatprep.subr.bf16.mxu0 0
    %491 = vmatpush1.bf16.xpose.msra.mxu0 0
    %492 = vmatprep.subr.bf16.mxu0 0
    %493 = vmatpush1.bf16.xpose.msra.mxu0 0
    %494 = vmatprep.subr.bf16.mxu0 0
    %495 = vmatpush1.bf16.xpose.msra.mxu0 0
    %496 = vmatprep.subr.bf16.mxu0 0
    %497 = vmatpush1.bf16.xpose.msra.mxu0 0
    %498 = vmatprep.subr.bf16.mxu0 0
    %499 = vmatpush1.bf16.xpose.msra.mxu0 0
    %500 = vmatprep.subr.bf16.mxu0 0
    %501 = vmatpush1.bf16.xpose.msra.mxu0 0
    %502 = vmatprep.subr.bf16.mxu0 0
    %503 = vmatpush1.bf16.xpose.msra.mxu0 0
    %504 = vmatprep.mubr.bf16.mxu0 0
    %505 = vmatmul.mubr.bf16.gmra.mrb[0].mxu0 %v467
    %v506 = vpop.f32.mrb[0].mxu0
    %v507 = vadd.f32 %v188, %v506
    %v508 = vpop.f32.mrb[0].mxu0
    %v509 = vpop.f32.mrb[0].mxu0
    %v510 = vpop.f32.mrb[0].mxu0
    %511 = vdwg.mxu0
    %v512 = vsel %vm290, %v457, -inf
    %513 = vmax.xlane.f32.xlu0 %v512
    %v514 = vpop.xlane.xlu0 %513
    %v515 = vsel %vm290, %v507, -inf
    %516 = vmax.xlane.f32.xlu0 %v515
    %v517 = vpop.xlane.xlu0 %516
    %v518 = vsub.f32 %v457, %v514
    %v519 = vsub.f32 %v507, %v517
    %v520 = vmul.f32 %v518, 1.442695
    %v521 = vpow.pop %v520
    %v522 = vmul.f32 %v519, 1.442695
    %v523 = vpow.pop %v522
    %v524 = vsel %vm290, %v521, 0.0
    %525 = vadd.xlane.f32.xlu0 %v524
    %v526 = vpop.xlane.xlu0 %525
    %v527 = vsel %vm290, %v523, 0.0
    %528 = vadd.xlane.f32.xlu0 %v527
    %v529 = vpop.xlane.xlu0 %528
    %v530 = vrcp.pop %v526
    %v531 = vrcp.pop %v529
    %v532 = vmul.f32 %v521, %v530
    %v533 = vmul.f32 %v523, %v531
    %v534 = vpack.c.bf16 %v532, %v532
    %v535 = vpack.c.bf16 %v533, %v533
    %536 = vrot.lane.b32.xlu0 %v177, 48
    %v537 = vpop.permute.xlu0 %536
    %v539 = vsel %vm290, %v534, 0
    %v542 = vsel %vm320, %v537, 0
    %544 = vmatprep.subr.bf16.mxu0 0
    %545 = vmatpush1.bf16.msra.mxu0 %v542
    %546 = vmatprep.subr.bf16.mxu0 0
    %547 = vmatpush1.bf16.msra.mxu0 0
    %548 = vmatprep.subr.bf16.mxu0 0
    %549 = vmatpush1.bf16.msra.mxu0 0
    %550 = vmatprep.subr.bf16.mxu0 0
    %551 = vmatpush1.bf16.msra.mxu0 0
    %552 = vmatprep.subr.bf16.mxu0 0
    %553 = vmatpush1.bf16.msra.mxu0 0
    %554 = vmatprep.subr.bf16.mxu0 0
    %555 = vmatpush1.bf16.msra.mxu0 0
    %556 = vmatprep.subr.bf16.mxu0 0
    %557 = vmatpush1.bf16.msra.mxu0 0
    %558 = vmatprep.subr.bf16.mxu0 0
    %559 = vmatpush1.bf16.msra.mxu0 0
    %560 = vmatprep.subr.bf16.mxu0 0
    %561 = vmatpush1.bf16.msra.mxu0 0
    %562 = vmatprep.subr.bf16.mxu0 0
    %563 = vmatpush1.bf16.msra.mxu0 0
    %564 = vmatprep.subr.bf16.mxu0 0
    %565 = vmatpush1.bf16.msra.mxu0 0
    %566 = vmatprep.subr.bf16.mxu0 0
    %567 = vmatpush1.bf16.msra.mxu0 0
    %568 = vmatprep.subr.bf16.mxu0 0
    %569 = vmatpush1.bf16.msra.mxu0 0
    %570 = vmatprep.subr.bf16.mxu0 0
    %571 = vmatpush1.bf16.msra.mxu0 0
    %572 = vmatprep.subr.bf16.mxu0 0
    %573 = vmatpush1.bf16.msra.mxu0 0
    %574 = vmatprep.subr.bf16.mxu0 0
    %575 = vmatpush1.bf16.msra.mxu0 0
    %576 = vmatprep.mubr.bf16.mxu0 0
    %577 = vmatmul.mubr.bf16.gmra.mrb[0].mxu0 %v539
    %v578 = vpop.f32.mrb[0].mxu0
    %v579 = vadd.f32 0.0, %v578
    %v580 = vpop.f32.mrb[0].mxu0
    %v581 = vpop.f32.mrb[0].mxu0
    %v582 = vpop.f32.mrb[0].mxu0
    %583 = vdwg.mxu0
    %584 = vrot.lane.b32.xlu0 %v178, 48
    %v585 = vpop.permute.xlu0 %584
    %v587 = vsel %vm290, %v535, 0
    %v590 = vsel %vm320, %v585, 0
    %592 = vmatprep.subr.bf16.mxu0 0
    %593 = vmatpush1.bf16.msra.mxu0 %v590
    %594 = vmatprep.subr.bf16.mxu0 0
    %595 = vmatpush1.bf16.msra.mxu0 0
    %596 = vmatprep.subr.bf16.mxu0 0
    %597 = vmatpush1.bf16.msra.mxu0 0
    %598 = vmatprep.subr.bf16.mxu0 0
    %599 = vmatpush1.bf16.msra.mxu0 0
    %600 = vmatprep.subr.bf16.mxu0 0
    %601 = vmatpush1.bf16.msra.mxu0 0
    %602 = vmatprep.subr.bf16.mxu0 0
    %603 = vmatpush1.bf16.msra.mxu0 0
    %604 = vmatprep.subr.bf16.mxu0 0
    %605 = vmatpush1.bf16.msra.mxu0 0
    %606 = vmatprep.subr.bf16.mxu0 0
    %607 = vmatpush1.bf16.msra.mxu0 0
    %608 = vmatprep.subr.bf16.mxu0 0
    %609 = vmatpush1.bf16.msra.mxu0 0
    %610 = vmatprep.subr.bf16.mxu0 0
    %611 = vmatpush1.bf16.msra.mxu0 0
    %612 = vmatprep.subr.bf16.mxu0 0
    %613 = vmatpush1.bf16.msra.mxu0 0
    %614 = vmatprep.subr.bf16.mxu0 0
    %615 = vmatpush1.bf16.msra.mxu0 0
    %616 = vmatprep.subr.bf16.mxu0 0
    %617 = vmatpush1.bf16.msra.mxu0 0
    %618 = vmatprep.subr.bf16.mxu0 0
    %619 = vmatpush1.bf16.msra.mxu0 0
    %620 = vmatprep.subr.bf16.mxu0 0
    %621 = vmatpush1.bf16.msra.mxu0 0
    %622 = vmatprep.subr.bf16.mxu0 0
    %623 = vmatpush1.bf16.msra.mxu0 0
    %624 = vmatprep.mubr.bf16.mxu0 0
    %625 = vmatmul.mubr.bf16.gmra.mrb[0].mxu0 %v587
    %v626 = vpop.f32.mrb[0].mxu0
    %v627 = vadd.f32 0.0, %v626
    %v628 = vpop.f32.mrb[0].mxu0
    %v629 = vpop.f32.mrb[0].mxu0
    %v630 = vpop.f32.mrb[0].mxu0
    %631 = vdwg.mxu0
    %634 = vrot.lane.b32.xlu0 %v579, 16
    %v635 = vpop.permute.xlu0 %634
    %636 = vrot.lane.b32.xlu0 %v627, 16
    %v637 = vpop.permute.xlu0 %636
    %v640 = vsel %vm194, %v359, %v635
    %v641 = vsel %vm194, %v407, %v637
    %v642 = vpack.c.bf16 %v641, %v640
    %v643 = vlaneseq
    %v644 = vshrl.u32 %v643, 7
    %v645 = vsub.s32 0, %v644
    %v646 = vrot.slane %v95, %v645
    %v651 = vunpack.c.l.b16 %v78
    %v652 = vunpack.c.l.b16 %v79
    %v653 = vunpack.c.l.b16 %v80
    %v654 = vunpack.c.l.b16 %v81
    %v655 = vpack.c.b16 %v652, %v651
    %v656 = vpack.c.b16 %v654, %v653
    %v660 = vsel %vm132, %v642, 0
    %662 = vmatprep.subr.bf16.mxu0 0
    %663 = vmatpush1.bf16.msra.mxu0 %v655
    %664 = vmatprep.subr.bf16.mxu0 0
    %665 = vmatpush1.bf16.msra.mxu0 %v656
    %666 = vmatprep.subr.bf16.mxu0 0
    %667 = vmatpush1.bf16.msra.mxu0 0
    %668 = vmatprep.subr.bf16.mxu0 0
    %669 = vmatpush1.bf16.msra.mxu0 0
    %670 = vmatprep.subr.bf16.mxu0 0
    %671 = vmatpush1.bf16.msra.mxu0 0
    %672 = vmatprep.subr.bf16.mxu0 0
    %673 = vmatpush1.bf16.msra.mxu0 0
    %674 = vmatprep.subr.bf16.mxu0 0
    %675 = vmatpush1.bf16.msra.mxu0 0
    %676 = vmatprep.subr.bf16.mxu0 0
    %677 = vmatpush1.bf16.msra.mxu0 0
    %678 = vmatprep.subr.bf16.mxu0 0
    %679 = vmatpush1.bf16.msra.mxu0 0
    %680 = vmatprep.subr.bf16.mxu0 0
    %681 = vmatpush1.bf16.msra.mxu0 0
    %682 = vmatprep.subr.bf16.mxu0 0
    %683 = vmatpush1.bf16.msra.mxu0 0
    %684 = vmatprep.subr.bf16.mxu0 0
    %685 = vmatpush1.bf16.msra.mxu0 0
    %686 = vmatprep.subr.bf16.mxu0 0
    %687 = vmatpush1.bf16.msra.mxu0 0
    %688 = vmatprep.subr.bf16.mxu0 0
    %689 = vmatpush1.bf16.msra.mxu0 0
    %690 = vmatprep.subr.bf16.mxu0 0
    %691 = vmatpush1.bf16.msra.mxu0 0
    %692 = vmatprep.subr.bf16.mxu0 0
    %693 = vmatpush1.bf16.msra.mxu0 0
    %694 = vmatprep.mubr.bf16.mxu0 0
    %695 = vmatmul.mubr.bf16.gmra.mrb[0].mxu0 %v660
    %v696 = vpop.f32.mrb[0].mxu0
    %v697 = vadd.f32 %v646, %v696
    %v698 = vpop.f32.mrb[0].mxu0
    %v699 = vpop.f32.mrb[0].mxu0
    %v700 = vadd.f32 %v646, %v699
    %v701 = vpop.f32.mrb[0].mxu0
    %702 = vdwg.mxu0
    %v703 = vadd.f32 %v107, %v697
    %v704 = vadd.f32 %v108, %v700
    %v705 = vsel %vm132, %v703, 0.0
    %706 = vadd.xlane.f32.xlu0 %v705
    %v707 = vpop.xlane.xlu0 %706
    %v708 = vsel %vm132, %v704, 0.0
    %709 = vadd.xlane.f32.xlu0 %v708
    %v710 = vpop.xlane.xlu0 %709
    %v711 = vrcp.pop 32.0
    %v712 = vmul.f32 %v707, %v711
    %v713 = vmul.f32 %v710, %v711
    %v714 = vsub.f32 %v703, %v712
    %v715 = vsub.f32 %v704, %v713
    %v716 = vmul.f32 %v714, %v714
    %v717 = vmul.f32 %v715, %v715
    %v718 = vsel %vm132, %v716, 0.0
    %719 = vadd.xlane.f32.xlu0 %v718
    %v720 = vpop.xlane.xlu0 %719
    %v721 = vsel %vm132, %v717, 0.0
    %722 = vadd.xlane.f32.xlu0 %v721
    %v723 = vpop.xlane.xlu0 %722
    %v724 = vmul.f32 %v720, %v711
    %v725 = vmul.f32 %v723, %v711
    %v726 = vadd.f32 %v724, 1e-05
    %v727 = vadd.f32 %v725, 1e-05
    %v728 = vrsqrt.pop %v726
    %v729 = vrsqrt.pop %v727
    %v730 = vmul.f32 %v714, %v728
    %v731 = vmul.f32 %v715, %v729
    %v732 = vlaneseq
    %v733 = vshrl.u32 %v732, 7
    %v734 = vsub.s32 0, %v733
    %v735 = vrot.slane %v96, %v734
    %v736 = vmul.f32 %v730, %v735
    %v737 = vmul.f32 %v731, %v735
    %v738 = vlaneseq
    %v739 = vshrl.u32 %v738, 7
    %v740 = vsub.s32 0, %v739
    %v741 = vrot.slane %v97, %v740
    %v742 = vadd.f32 %v736, %v741
    %v743 = vadd.f32 %v737, %v741
    %v744 = vpack.c.bf16 %v743, %v742
    %v745 = vlaneseq
    %v746 = vshrl.u32 %v745, 7
    %v747 = vsub.s32 0, %v746
    %v748 = vrot.slane %v98, %v747
    %v753 = vunpack.c.l.b16 %v82
    %v754 = vunpack.c.l.b16 %v83
    %v755 = vunpack.c.l.b16 %v84
    %v756 = vunpack.c.l.b16 %v85
    %v757 = vpack.c.b16 %v754, %v753
    %v758 = vpack.c.b16 %v756, %v755
    %v762 = vsel %vm132, %v744, 0
    %764 = vmatprep.subr.bf16.mxu0 0
    %765 = vmatpush1.bf16.msra.mxu0 %v757
    %766 = vmatprep.subr.bf16.mxu0 0
    %767 = vmatpush1.bf16.msra.mxu0 %v758
    %768 = vmatprep.subr.bf16.mxu0 0
    %769 = vmatpush1.bf16.msra.mxu0 0
    %770 = vmatprep.subr.bf16.mxu0 0
    %771 = vmatpush1.bf16.msra.mxu0 0
    %772 = vmatprep.subr.bf16.mxu0 0
    %773 = vmatpush1.bf16.msra.mxu0 0
    %774 = vmatprep.subr.bf16.mxu0 0
    %775 = vmatpush1.bf16.msra.mxu0 0
    %776 = vmatprep.subr.bf16.mxu0 0
    %777 = vmatpush1.bf16.msra.mxu0 0
    %778 = vmatprep.subr.bf16.mxu0 0
    %779 = vmatpush1.bf16.msra.mxu0 0
    %780 = vmatprep.subr.bf16.mxu0 0
    %781 = vmatpush1.bf16.msra.mxu0 0
    %782 = vmatprep.subr.bf16.mxu0 0
    %783 = vmatpush1.bf16.msra.mxu0 0
    %784 = vmatprep.subr.bf16.mxu0 0
    %785 = vmatpush1.bf16.msra.mxu0 0
    %786 = vmatprep.subr.bf16.mxu0 0
    %787 = vmatpush1.bf16.msra.mxu0 0
    %788 = vmatprep.subr.bf16.mxu0 0
    %789 = vmatpush1.bf16.msra.mxu0 0
    %790 = vmatprep.subr.bf16.mxu0 0
    %791 = vmatpush1.bf16.msra.mxu0 0
    %792 = vmatprep.subr.bf16.mxu0 0
    %793 = vmatpush1.bf16.msra.mxu0 0
    %794 = vmatprep.subr.bf16.mxu0 0
    %795 = vmatpush1.bf16.msra.mxu0 0
    %796 = vmatprep.mubr.bf16.mxu0 0
    %797 = vmatmul.mubr.bf16.gmra.mrb[0].mxu0 %v762
    %v798 = vpop.f32.mrb[0].mxu0
    %v799 = vadd.f32 %v748, %v798
    %v800 = vpop.f32.mrb[0].mxu0
    %v801 = vpop.f32.mrb[0].mxu0
    %v802 = vadd.f32 %v748, %v801
    %v803 = vpop.f32.mrb[0].mxu0
    %804 = vdwg.mxu0
    %v805 = vmax.f32 %v799, 0.0
    %v806 = vmax.f32 %v802, 0.0
    %v807 = vpack.c.bf16 %v806, %v805
    %v808 = vlaneseq
    %v809 = vshrl.u32 %v808, 7
    %v810 = vsub.s32 0, %v809
    %v811 = vrot.slane %v99, %v810
    %v820 = vunpack.c.l.b16 %v86
    %v821 = vunpack.c.l.b16 %v87
    %v822 = vunpack.c.l.b16 %v88
    %v823 = vunpack.c.l.b16 %v89
    %v824 = vunpack.c.l.b16 %v90
    %v825 = vunpack.c.l.b16 %v91
    %v826 = vunpack.c.l.b16 %v92
    %v827 = vunpack.c.l.b16 %v93
    %v828 = vpack.c.b16 %v821, %v820
    %v829 = vpack.c.b16 %v823, %v822
    %v830 = vpack.c.b16 %v825, %v824
    %v831 = vpack.c.b16 %v827, %v826
    %vm836 = vcmask 523264
    %v838 = vsel %vm836, %v807, 0
    %840 = vmatprep.subr.bf16.mxu0 0
    %841 = vmatpush1.bf16.msra.mxu0 %v828
    %842 = vmatprep.subr.bf16.mxu0 0
    %843 = vmatpush1.bf16.msra.mxu0 %v829
    %844 = vmatprep.subr.bf16.mxu0 0
    %845 = vmatpush1.bf16.msra.mxu0 %v830
    %846 = vmatprep.subr.bf16.mxu0 0
    %847 = vmatpush1.bf16.msra.mxu0 %v831
    %848 = vmatprep.subr.bf16.mxu0 0
    %849 = vmatpush1.bf16.msra.mxu0 0
    %850 = vmatprep.subr.bf16.mxu0 0
    %851 = vmatpush1.bf16.msra.mxu0 0
    %852 = vmatprep.subr.bf16.mxu0 0
    %853 = vmatpush1.bf16.msra.mxu0 0
    %854 = vmatprep.subr.bf16.mxu0 0
    %855 = vmatpush1.bf16.msra.mxu0 0
    %856 = vmatprep.subr.bf16.mxu0 0
    %857 = vmatpush1.bf16.msra.mxu0 0
    %858 = vmatprep.subr.bf16.mxu0 0
    %859 = vmatpush1.bf16.msra.mxu0 0
    %860 = vmatprep.subr.bf16.mxu0 0
    %861 = vmatpush1.bf16.msra.mxu0 0
    %862 = vmatprep.subr.bf16.mxu0 0
    %863 = vmatpush1.bf16.msra.mxu0 0
    %864 = vmatprep.subr.bf16.mxu0 0
    %865 = vmatpush1.bf16.msra.mxu0 0
    %866 = vmatprep.subr.bf16.mxu0 0
    %867 = vmatpush1.bf16.msra.mxu0 0
    %868 = vmatprep.subr.bf16.mxu0 0
    %869 = vmatpush1.bf16.msra.mxu0 0
    %870 = vmatprep.subr.bf16.mxu0 0
    %871 = vmatpush1.bf16.msra.mxu0 0
    %872 = vmatprep.mubr.bf16.mxu0 0
    %873 = vmatmul.mubr.bf16.gmra.mrb[0].mxu0 %v838
    %v874 = vpop.f32.mrb[0].mxu0
    %v875 = vadd.f32 %v811, %v874
    %v876 = vpop.f32.mrb[0].mxu0
    %v877 = vpop.f32.mrb[0].mxu0
    %v878 = vadd.f32 %v811, %v877
    %v879 = vpop.f32.mrb[0].mxu0
    %880 = vdwg.mxu0
    %v881 = vadd.f32 %v742, %v875
    %v882 = vadd.f32 %v743, %v878
    %v883 = vsel %vm132, %v881, 0.0
    %884 = vadd.xlane.f32.xlu0 %v883
    %v885 = vpop.xlane.xlu0 %884
    %v886 = vsel %vm132, %v882, 0.0
    %887 = vadd.xlane.f32.xlu0 %v886
    %v888 = vpop.xlane.xlu0 %887
    %v889 = vmul.f32 %v885, %v711
    %v890 = vmul.f32 %v888, %v711
    %v891 = vsub.f32 %v881, %v889
    %v892 = vsub.f32 %v882, %v890
    %v893 = vmul.f32 %v891, %v891
    %v894 = vmul.f32 %v892, %v892
    %v895 = vsel %vm132, %v893, 0.0
    %896 = vadd.xlane.f32.xlu0 %v895
    %v897 = vpop.xlane.xlu0 %896
    %v898 = vsel %vm132, %v894, 0.0
    %899 = vadd.xlane.f32.xlu0 %v898
    %v900 = vpop.xlane.xlu0 %899
    %v901 = vmul.f32 %v897, %v711
    %v902 = vmul.f32 %v900, %v711
    %v903 = vadd.f32 %v901, 1e-05
    %v904 = vadd.f32 %v902, 1e-05
    %v905 = vrsqrt.pop %v903
    %v906 = vrsqrt.pop %v904
    %v907 = vmul.f32 %v891, %v905
    %v908 = vmul.f32 %v892, %v906
    %v909 = vlaneseq
    %v910 = vshrl.u32 %v909, 7
    %v911 = vsub.s32 0, %v910
    %v912 = vrot.slane %v100, %v911
    %v913 = vmul.f32 %v907, %v912
    %v914 = vmul.f32 %v908, %v912
    %v915 = vlaneseq
    %v916 = vshrl.u32 %v915, 7
    %v917 = vsub.s32 0, %v916
    %v918 = vrot.slane %v101, %v917
    %v919 = vadd.f32 %v913, %v918
    %v920 = vadd.f32 %v914, %v918
    %v921 = vsel %vm132, %v919, 0.0
    %v922 = vrot.slane %v921, 4
    %v923 = vadd.f32 %v921, %v922
    %v924 = vrot.slane %v923, 2
    %v925 = vadd.f32 %v923, %v924
    %v926 = vrot.slane %v925, 1
    %v927 = vadd.f32 %v925, %v926
    %v928 = vsel %vm132, %v920, 0.0
    %v929 = vrot.slane %v928, 4
    %v930 = vadd.f32 %v928, %v929
    %v931 = vrot.slane %v930, 2
    %v932 = vadd.f32 %v930, %v931
    %v933 = vrot.slane %v932, 1
    %v934 = vadd.f32 %v932, %v933
    %v935 = vrcp.pop 8.0
    %v936 = vmul.f32 %v927, %v935
    %v937 = vmul.f32 %v934, %v935
    %v938 = vlaneseq
    %v939 = vshrl.u32 %v938, 7
    %v940 = vsub.s32 0, %v939
    %v941 = vrot.slane %v102, %v940
    %v942 = vmul.f32 %v936, %v941
    %v943 = vmul.f32 %v937, %v941
    %v946 = vrot.slane %v943, 7
    %vm947 = vcmask 1041409
    %v948 = vsel %vm947, %v946, %v942
    %vm950 = vcmask 254976
    %v951 = vsel %vm950, %v948, 0.0
    %952 = vadd.xlane.f32.xlu0 %v951
    %v953 = vpop.xlane.xlu0 %952
    %v954 = vlaneseq
    %v955 = vshrl.u32 %v954, 7
    %v956 = vsub.s32 0, %v955
    %v957 = vrot.slane %v103, %v956
    %v958 = vadd.f32 %v953, %v957
    %v959 = vxor.u32 %v958, 2147483648
    %v960 = vmul.f32 %v959, 1.442695
    %v961 = vpow.pop %v960
    %v962 = vadd.f32 %v961, 1.0
    %v963 = vrcp.pop %v962
    %v964 = vmul.f32 1.0, %v963
    %vm965 = vcmask 1024
    %966 = vst.msk [vmem:[%s5] sm:$0x3] %vm965, %v964
    // Predicated region
    $region38: #{tpu_custom_call.1} parent=1 // pred_check
      _
    $region39: #{tpu_custom_call.1} parent=1 // pred_check_branch
      %968 = sbr.rel (0) target = $region41
    $region40: #{tpu_custom_call.1} parent=1 // pred_region
      _
    $region41: #{tpu_custom_call.1} parent=1 // pred_fallthru
      _
    // Predicated region
    $region42: #{tpu_custom_call.1} parent=1 // pred_check
      _
    $region43: #{tpu_custom_call.1} parent=1 // pred_check_branch
      %970 = sbr.rel (0) target = $region45
    $region44: #{tpu_custom_call.1} parent=1 // pred_region
      _
    $region45: #{tpu_custom_call.1} parent=1 // pred_fallthru
      _
    %971 = vsyncpa [#allocation3], 1
    %972 = vsyncpa [#allocation5], 1
    %973 = vsyncpa [#allocation8], 1

</llo_original>
